<compile_context>
chip_gen: v7x
topology: tpu7x:2x2x1
jax: 0.10.0
libtpu: 0.0.40
codegen_flags: <defaults>
</compile_context>

<pallas_src>
import functools

import jax
import jax.numpy as jnp
from jax.experimental import pallas as pl
from jax.experimental.pallas import tpu as pltpu

EPS = 1e-12          # F.normalize default eps
DEFAULT_TB = 4096    # rows per batch tile (2 bufs * (x+out) tile + W ~= 8.3 MiB VMEM)


def header_kernel(x_ref, wt_ref, o_ref):
    # x_ref: [TB, 128]   wt_ref: [128, 128] (= W.T, [in, out])   o_ref: [TB, 128]
    x = x_ref[...]
    wt = wt_ref[...]
    # Linear (no bias): y = x @ W.T == x @ wt  (wt pre-transposed in the wrapper,
    # so no per-step XLU transpose is emitted in the body).
    y = jnp.dot(x, wt, preferred_element_type=jnp.float32)        # MXU
    # L2 normalize along dim=1: y / max(||y||, eps) == y * rsqrt(max(sum(y^2), eps^2))
    sq_sum = jnp.sum(y * y, axis=1, keepdims=True)                # XLU reduction
    inv = jax.lax.rsqrt(jnp.maximum(sq_sum, EPS * EPS))           # EUP rsqrt, one per row
    o_ref[...] = (y * inv).astype(o_ref.dtype)


def _round_up(v, m):
    return ((v + m - 1) // m) * m


@functools.partial(jax.jit, static_argnames=("tile_b",))
def header_forward(x, weight, *, tile_b=DEFAULT_TB):
    """x: [B, 128] float32; weight: [128, 128] (PyTorch nn.Linear layout [out, in])."""
    B, D_in = x.shape
    D_out, D_in_w = weight.shape
    assert D_in == D_in_w == 128 and D_out == 128

    # Tile: at most tile_b rows, never (much) larger than the batch, always a
    # multiple of the f32 sublane count (8).
    tb = min(_round_up(tile_b, 8), _round_up(B, 8))
    # Keep >= 2 grid steps for moderate/large batches so the "parallel" batch
    # axis can be sharded across both TensorCores on v7x.
    if B > 1024:
        tb = min(tb, _round_up((B + 1) // 2, 8))

    # Ragged tail handled by Pallas edge-block masking — no jnp.pad / out[:B] slice,
    # so no extra full HBM read+write of x and out for non-tile-multiple batches.
    grid = (pl.cdiv(B, tb),)

    # One-time 64 KiB transpose in the wrapper; the kernel then contracts on the
    # natural (1, 0) dims with no in-body vxpose per grid step.
    wt = weight.T

    cost = pl.CostEstimate(
        flops=2 * B * D_in * D_out,
        transcendentals=B,
        bytes_accessed=B * D_in * 4 + B * D_out * 4 + D_in * D_out * 4,
    )

    out = pl.pallas_call(
        header_kernel,
        out_shape=jax.ShapeDtypeStruct((B, D_out), jnp.float32),
        grid_spec=pltpu.PrefetchScalarGridSpec(
            num_scalar_prefetch=0,
            grid=grid,
            in_specs=[
                pl.BlockSpec((tb, D_in), lambda i: (i, 0)),        # x tile, streamed
                pl.BlockSpec((D_in, D_out), lambda i: (0, 0)),     # W.T resident in VMEM
            ],
            out_specs=pl.BlockSpec((tb, D_out), lambda i: (i, 0)),
        ),
        compiler_params=pltpu.CompilerParams(
            dimension_semantics=("parallel",),   # shard batch tiles across TCs (v7x)
            vmem_limit_bytes=32 * 1024 * 1024,   # headroom for tile sweeps (v5e default is 16 MiB)
        ),
        cost_estimate=cost,
    )(x, wt)
    return out


def reference_forward(x, weight):
    y = x @ weight.T
    n = jnp.sqrt(jnp.sum(y * y, axis=1, keepdims=True))
    return y / jnp.maximum(n, EPS)


if __name__ == "__main__":
    key = jax.random.PRNGKey(0)
    kx, kw, kx2, kx3 = jax.random.split(key, 4)

    B, D = 8, 128
    x = jax.random.normal(kx, (B, D), dtype=jnp.float32)
    # Deterministic weight init mimicking nn.Linear's uniform(-1/sqrt(in), 1/sqrt(in)),
    # PyTorch layout [out, in].
    bound = 1.0 / jnp.sqrt(jnp.float32(D))
    weight = jax.random.uniform(kw, (D, D), dtype=jnp.float32,
                                minval=-bound, maxval=bound)

    out = header_forward(x, weight)
    out = jax.block_until_ready(out)
    ref = reference_forward(x, weight)
    assert out.shape == (B, D)
    assert jnp.allclose(out, ref, atol=1e-5, rtol=1e-5), "mismatch vs reference (B=8)"

    # Ragged batch / multi-step grid (B not a multiple of the tile), small tile.
    B2 = 300
    x2 = jax.random.normal(kx2, (B2, D), dtype=jnp.float32)
    out2 = jax.block_until_ready(header_forward(x2, weight, tile_b=128))
    ref2 = reference_forward(x2, weight)
    assert out2.shape == (B2, D)
    assert jnp.allclose(out2, ref2, atol=1e-5, rtol=1e-5), "mismatch vs reference (B=300)"

    # Megacore-split path (B > 1024 -> 2 grid steps) with a ragged tail.
    B3 = 1537
    x3 = jax.random.normal(kx3, (B3, D), dtype=jnp.float32)
    out3 = jax.block_until_ready(header_forward(x3, weight))
    ref3 = reference_forward(x3, weight)
    assert out3.shape == (B3, D)
    assert jnp.allclose(out3, ref3, atol=1e-5, rtol=1e-5), "mismatch vs reference (B=1537)"

    print("KERNEL_OK")
</pallas_src>

<mosaic_0001>
module attributes {stable_mosaic.version = 11 : i64} {
  func.func @header_kernel(%arg0: i32, %arg1: memref<8x128xf32, #tpu.memory_space<vmem>>, %arg2: memref<128x128xf32, #tpu.memory_space<vmem>>, %arg3: memref<8x128xf32, #tpu.memory_space<vmem>>) attributes {dimension_semantics = [#tpu.dimension_semantics<parallel>], iteration_bounds = array<i64: 1>, scalar_prefetch = 0 : i64, scratch_operands = 0 : i64, tpu.core_type = #tpu.core_type<tc>, window_params = [{transform_indices = @transform_0, window_bounds = array<i64: 8, 128>}, {pipeline_mode = #tpu.pipeline_mode<synchronous>, transform_indices = @transform_1, window_bounds = array<i64: 128, 128>}, {transform_indices = @transform_2, window_bounds = array<i64: 8, 128>}]} {
    %c0 = arith.constant 0 : index
    %c0_0 = arith.constant 0 : index
    %0 = vector.load %arg1[%c0, %c0_0] : memref<8x128xf32, #tpu.memory_space<vmem>>, vector<8x128xf32>
    %c0_1 = arith.constant 0 : index
    %c0_2 = arith.constant 0 : index
    %1 = vector.load %arg2[%c0_1, %c0_2] : memref<128x128xf32, #tpu.memory_space<vmem>>, vector<128x128xf32>
    %cst = arith.constant dense<0.000000e+00> : vector<8x128xf32>
    %2 = tpu.matmul %0, %1, %cst {dimension_numbers = #tpu.dot_dimension_numbers<[1], [0], [0], [1], [0, 0, 1, 1], [], []>} : vector<8x128xf32>, vector<128x128xf32>, vector<8x128xf32> -> vector<8x128xf32>
    %3 = arith.mulf %2, %2 : vector<8x128xf32>
    %cst_3 = arith.constant dense<0.000000e+00> : vector<8xf32>
    %4 = vector.multi_reduction <add>, %3, %cst_3 [1] : vector<8x128xf32> to vector<8xf32>
    %5 = vector.shape_cast %4 : vector<8xf32> to vector<8x1xf32>
    %cst_4 = arith.constant 1.000000e-24 : f32
    %6 = vector.broadcast %cst_4 : f32 to vector<8x1xf32>
    %7 = arith.maximumf %5, %6 : vector<8x1xf32>
    %8 = math.rsqrt %7 : vector<8x1xf32>
    %9 = vector.broadcast %8 : vector<8x1xf32> to vector<8x128xf32>
    %10 = arith.mulf %2, %9 : vector<8x128xf32>
    %c0_5 = arith.constant 0 : index
    %c0_6 = arith.constant 0 : index
    %11 = vector.load %arg3[%c0_5, %c0_6] : memref<8x128xf32, #tpu.memory_space<vmem>>, vector<8x128xf32>
    tpu.vector_store %arg3[%c0_5, %c0_6], %10 {strides = array<i32>} : memref<8x128xf32, #tpu.memory_space<vmem>>, vector<8x128xf32>,
    return
  }
  func.func @transform_0(%arg0: i32) -> (i32, i32) {
    %c0_i32 = arith.constant 0 : i32
    %c0_i32_0 = arith.constant 0 : i32
    return %arg0, %c0_i32 : i32, i32
  }
  func.func @transform_1(%arg0: i32) -> (i32, i32) {
    %c0_i32 = arith.constant 0 : i32
    %c0_i32_0 = arith.constant 0 : i32
    %c0_i32_1 = arith.constant 0 : i32
    return %c0_i32, %c0_i32_0 : i32, i32
  }
  func.func @transform_2(%arg0: i32) -> (i32, i32) {
    %c0_i32 = arith.constant 0 : i32
    %c0_i32_0 = arith.constant 0 : i32
    return %arg0, %c0_i32 : i32, i32
  }
}

</mosaic_0001>

<llo_original>
// kernel: header_forward.1
$region0: #{header_forward.1}
  #allocation0 [shape = 'u32[]', space=smem, size = 0x4, offset = 0x4, fixed_abs, tag = 'smem constant byte address 0x4 - core index']
  #allocation1 [shape = 'u32[144,128]{1,0:T(1,128)}', space=vmem, size = 0x12000, scoped, tag = 'internal scratch']
  %s0 = inlined_call_operand.vmem [shape: f32[8,128], index: 0, kind: input, shape index: {}]
  %s1 = inlined_call_operand.vmem [shape: f32[128,128], index: 1, kind: input, shape index: {}]
  %s2 = inlined_call_operand.hbm [shape: f32[8,128], index: 2, kind: output, shape index: {}]
  %s3 = sld [smem:[#allocation0]]
  $region18: #{header_forward.1} parent=0
    _
  %s5 = ssub.s32 1, %s3
  %s6 = scalar_select 0, %s5, %s3
  $region1: #{header_forward.1} parent=0
    #allocation2 [shape = 'u8[4096]{0}', space=vmem, size = 0x1000, scoped, tag = 'output window, operand 0, single buffered']
    #allocation3 [shape = 's32[1]{0}', space=sflag, size = 0x4, scoped, tag = 'scoped memory for header_forward.1']
    %7 = vsyncpa [#allocation3], 0
    // Predicated region
    $region2: #{header_forward.1} parent=1 // pred_check
      _
    $region3: #{header_forward.1} parent=1 // pred_check_branch
      %9 = sbr.rel (0) target = $region5
    $region4: #{header_forward.1} parent=1 // pred_region
      _
    $region5: #{header_forward.1} parent=1 // pred_fallthru
      _
    // Predicated region
    $region6: #{header_forward.1} parent=1 // pred_check
      _
    $region7: #{header_forward.1} parent=1 // pred_check_branch
      %11 = sbr.rel (0) target = $region9
    $region8: #{header_forward.1} parent=1 // pred_region
      _
    $region9: #{header_forward.1} parent=1 // pred_fallthru
      _
    %v12 = vld [vmem:[%s0] sm:$0xff]
    %v13 = vld [vmem:[%s1] sm:$0xff]
    %v14 = vld [vmem:[%s1 + $0x8] sm:$0xff]
    %v15 = vld [vmem:[%s1 + $0x10] sm:$0xff]
    %v16 = vld [vmem:[%s1 + $0x18] sm:$0xff]
    %v17 = vld [vmem:[%s1 + $0x20] sm:$0xff]
    %v18 = vld [vmem:[%s1 + $0x28] sm:$0xff]
    %v19 = vld [vmem:[%s1 + $0x30] sm:$0xff]
    %v20 = vld [vmem:[%s1 + $0x38] sm:$0xff]
    %v21 = vld [vmem:[%s1 + $0x40] sm:$0xff]
    %v22 = vld [vmem:[%s1 + $0x48] sm:$0xff]
    %v23 = vld [vmem:[%s1 + $0x50] sm:$0xff]
    %v24 = vld [vmem:[%s1 + $0x58] sm:$0xff]
    %v25 = vld [vmem:[%s1 + $0x60] sm:$0xff]
    %v26 = vld [vmem:[%s1 + $0x68] sm:$0xff]
    %v27 = vld [vmem:[%s1 + $0x70] sm:$0xff]
    %v28 = vld [vmem:[%s1 + $0x78] sm:$0xff]
    %29 = vmatprep.subr.mxu0 0.0
    %30 = vmatpush1.msra.mxu0 %v13
    %31 = vmatprep.subr.mxu0 0.0
    %32 = vmatpush1.msra.mxu0 %v14
    %33 = vmatprep.subr.mxu0 0.0
    %34 = vmatpush1.msra.mxu0 %v15
    %35 = vmatprep.subr.mxu0 0.0
    %36 = vmatpush1.msra.mxu0 %v16
    %37 = vmatprep.subr.mxu0 0.0
    %38 = vmatpush1.msra.mxu0 %v17
    %39 = vmatprep.subr.mxu0 0.0
    %40 = vmatpush1.msra.mxu0 %v18
    %41 = vmatprep.subr.mxu0 0.0
    %42 = vmatpush1.msra.mxu0 %v19
    %43 = vmatprep.subr.mxu0 0.0
    %44 = vmatpush1.msra.mxu0 %v20
    %45 = vmatprep.subr.mxu0 0.0
    %46 = vmatpush1.msra.mxu0 %v21
    %47 = vmatprep.subr.mxu0 0.0
    %48 = vmatpush1.msra.mxu0 %v22
    %49 = vmatprep.subr.mxu0 0.0
    %50 = vmatpush1.msra.mxu0 %v23
    %51 = vmatprep.subr.mxu0 0.0
    %52 = vmatpush1.msra.mxu0 %v24
    %53 = vmatprep.subr.mxu0 0.0
    %54 = vmatpush1.msra.mxu0 %v25
    %55 = vmatprep.subr.mxu0 0.0
    %56 = vmatpush1.msra.mxu0 %v26
    %57 = vmatprep.subr.mxu0 0.0
    %58 = vmatpush1.msra.mxu0 %v27
    %59 = vmatprep.subr.mxu0 0.0
    %60 = vmatpush1.msra.mxu0 %v28
    %61 = vmatprep.subr.mxu0 0.0
    %62 = vmatpush1.msra.mxu0 0.0
    %63 = vmatprep.subr.mxu0 0.0
    %64 = vmatpush1.msra.mxu0 0.0
    %65 = vmatprep.subr.mxu0 0.0
    %66 = vmatpush1.msra.mxu0 0.0
    %67 = vmatprep.subr.mxu0 0.0
    %68 = vmatpush1.msra.mxu0 0.0
    %69 = vmatprep.subr.mxu0 0.0
    %70 = vmatpush1.msra.mxu0 0.0
    %71 = vmatprep.subr.mxu0 0.0
    %72 = vmatpush1.msra.mxu0 0.0
    %73 = vmatprep.subr.mxu0 0.0
    %74 = vmatpush1.msra.mxu0 0.0
    %75 = vmatprep.subr.mxu0 0.0
    %76 = vmatpush1.msra.mxu0 0.0
    %77 = vmatprep.subr.mxu0 0.0
    %78 = vmatpush1.msra.mxu0 0.0
    %79 = vmatprep.subr.mxu0 0.0
    %80 = vmatpush1.msra.mxu0 0.0
    %81 = vmatprep.subr.mxu0 0.0
    %82 = vmatpush1.msra.mxu0 0.0
    %83 = vmatprep.subr.mxu0 0.0
    %84 = vmatpush1.msra.mxu0 0.0
    %85 = vmatprep.subr.mxu0 0.0
    %86 = vmatpush1.msra.mxu0 0.0
    %87 = vmatprep.subr.mxu0 0.0
    %88 = vmatpush1.msra.mxu0 0.0
    %89 = vmatprep.subr.mxu0 0.0
    %90 = vmatpush1.msra.mxu0 0.0
    %91 = vmatprep.subr.mxu0 0.0
    %92 = vmatpush1.msra.mxu0 0.0
    %93 = vmatprep.mubr.f32.mxu0 0.0
    %94 = vmatmul.mubr.f32.gmra.mrb[0].mxu0 %v12
    %v95 = vpop.f32.mrb[0].mxu0
    %v96 = vadd.f32 0.0, %v95
    %v97 = vpop.f32.mrb[0].mxu0
    %98 = vdwg.mxu0
    %v99 = vmul.f32 %v96, %v96
    %100 = vadd.xlane.f32.xlu0 %v99
    %v101 = vpop.xlane.xlu0 %100
    %v102 = vmax.f32 %v101, 1e-24
    %v103 = vrsqrt.pop %v102
    %v104 = vmul.f32 %v96, %v103
    %105 = vst [vmem:[#allocation2] sm:$0xff] %v104
    // Predicated region
    $region10: #{header_forward.1} parent=1 // pred_check
      _
    $region11: #{header_forward.1} parent=1 // pred_check_branch
      %107 = sbr.rel (0) target = $region13
    $region12: #{header_forward.1} parent=1 // pred_region
      %s109 = ssub.s32 128, 128
      %110 = vsyncadd [#allocation3], %s109
      %s112 = sshll.u32 [#allocation2], 4
      %s113 = int_to_ptr.vmem [resolvable:$true] %s112
      %115 = dma.vmem_to_hbm [thread:$0]  %s113, 128, %s2, [#allocation3]
    $region13: #{header_forward.1} parent=1 // pred_fallthru
      _
    // Predicated region
    $region14: #{header_forward.1} parent=1 // pred_check
      _
    $region15: #{header_forward.1} parent=1 // pred_check_branch
      %117 = sbr.rel (0) target = $region17
    $region16: #{header_forward.1} parent=1 // pred_region
      %118 = dma.done [#allocation3], 128
    $region17: #{header_forward.1} parent=1 // pred_fallthru
      _
    %119 = vsyncpa [#allocation3], 1

</llo_original>
